<compile_context>
chip_gen: v6e
topology: v6e:2x2x1
jax: 0.10.0
libtpu: 0.0.40
codegen_flags: <defaults>
</compile_context>

<pallas_src>
import functools

import jax
import jax.numpy as jnp
from jax.experimental import pallas as pl
from jax.experimental.pallas import tpu as pltpu

EPS = 1e-5
LANE = 128


def _round_up(x, m):
    return ((x + m - 1) // m) * m


def _vmem_budget_bytes():
    """~0.75x physical VMEM, capped at 100 MiB (headroom for Mosaic scratch)."""
    cap = 64 * 1024 * 1024  # conservative fallback (v7x-sized)
    try:
        cap = int(getattr(pltpu.get_tpu_info(), "vmem_capacity_bytes", cap))
    except Exception:
        pass
    return int(min(0.75 * cap, 100 * 1024 * 1024))


def _is_v5e():
    try:
        kind = jax.devices()[0].device_kind.lower()
        return ("v5 lite" in kind) or ("v5e" in kind) or ("v5litepod" in kind)
    except Exception:
        return False


# ----------------------------------------------------------------------------
# Kernels
# ----------------------------------------------------------------------------
def _bn_finalize(y, g_row, b_row, out_dtype):
    """Fold BN into scale/shift: out = y*scale + shift."""
    inv_n = 1.0 / y.shape[0]
    mean = jnp.sum(y, axis=0, keepdims=True) * inv_n               # (1, TN)
    diff = y - mean
    var = jnp.sum(diff * diff, axis=0, keepdims=True) * inv_n      # biased var
    inv_std = jax.lax.rsqrt(var + EPS)                             # EUP slot
    scale = g_row.astype(jnp.float32) * inv_std
    shift = b_row.astype(jnp.float32) - mean * scale
    return (y * scale + shift).astype(out_dtype)


def _disentangler_small_kernel(x_ref, w_ref, g_ref, b_ref, o_ref):
    # Single block: full (B, D) @ (D, D) on the MXU, BN finalize, one store.
    y = jax.lax.dot_general(
        x_ref[...], w_ref[...],
        dimension_numbers=(((1,), (0,)), ((), ())),
        preferred_element_type=jnp.float32,
    )
    o_ref[...] = _bn_finalize(y, g_ref[...], b_ref[...], o_ref.dtype)


def _disentangler_grid_kernel(x_ref, w_ref, g_ref, b_ref, o_ref, acc_ref,
                              *, tile_k, x_resident):
    # Grid = (N tiles [parallel], K tiles [arbitrary, reduction]).
    k = pl.program_id(1)

    @pl.when(k == 0)
    def _init():
        acc_ref[...] = jnp.zeros_like(acc_ref)

    if x_resident:
        k0 = pl.multiple_of(k * tile_k, tile_k)
        xk = x_ref[:, pl.ds(k0, tile_k)]        # slice resident x (single HBM read)
    else:
        xk = x_ref[...]                          # tiled fallback

    # (B, TK) @ (TK, TN): weight already in (in, out) layout -> no per-tile
    # transpose; inputs stay in their native dtype, accumulate in f32.
    acc_ref[...] += jax.lax.dot_general(
        xk, w_ref[...],
        dimension_numbers=(((1,), (0,)), ((), ())),
        preferred_element_type=jnp.float32,
    )

    @pl.when(k == pl.num_programs(1) - 1)
    def _finalize():
        o_ref[...] = _bn_finalize(acc_ref[...], g_ref[...], b_ref[...], o_ref.dtype)


# ----------------------------------------------------------------------------
# Jitted forwards
# ----------------------------------------------------------------------------
@jax.jit
def _forward_small(x, w_t, g2, b2):
    B, D = x.shape
    return pl.pallas_call(
        _disentangler_small_kernel,
        out_shape=jax.ShapeDtypeStruct((B, D), x.dtype),
    )(x, w_t, g2, b2)


@functools.partial(jax.jit, static_argnames=("tile_n", "tile_k", "vmem_budget"))
def _forward_grid(x, w_t, g2, b2, *, tile_n, tile_k, vmem_budget):
    B, D = x.shape
    k_pad, n_pad = w_t.shape
    n_tiles = n_pad // tile_n
    k_tiles = k_pad // tile_k

    # Only the activation is (maybe) padded per call; padded K rows of w_t are
    # zero, so the padded K tail contributes nothing to the reduction.
    if k_pad != D:
        x = jnp.pad(x, ((0, 0), (0, k_pad - D)))

    x_item = jnp.dtype(x.dtype).itemsize
    w_item = jnp.dtype(w_t.dtype).itemsize
    # Conservative VMEM estimate (assume double-buffering everywhere).
    fixed = (2 * tile_k * tile_n * w_item          # weight double buffer
             + 2 * B * tile_n * x_item             # output double buffer
             + B * tile_n * 4                      # f32 accumulator
             + 4 * 2 * tile_n * 4                  # gamma/beta tiles
             + (1 << 20))                          # slack for Mosaic internals
    x_resident = (2 * B * k_pad * x_item + fixed) <= vmem_budget

    if x_resident:
        x_spec = pl.BlockSpec((B, k_pad), lambda j, k: (0, 0))      # one HBM read
    else:
        x_spec = pl.BlockSpec((B, tile_k), lambda j, k: (0, k))

    kernel = functools.partial(_disentangler_grid_kernel,
                               tile_k=tile_k, x_resident=x_resident)

    # Note: if profiling shows exposed weight-DMA time, add
    # pipeline_mode=pl.Buffered(3) to the weight BlockSpec instead of shrinking tiles.
    return pl.pallas_call(
        kernel,
        out_shape=jax.ShapeDtypeStruct((B, D), x.dtype),            # ragged N tile masked
        grid=(n_tiles, k_tiles),
        in_specs=[
            x_spec,
            pl.BlockSpec((tile_k, tile_n), lambda j, k: (k, j)),    # weight_t (in, out)
            pl.BlockSpec((1, tile_n), lambda j, k: (0, j)),         # gamma
            pl.BlockSpec((1, tile_n), lambda j, k: (0, j)),         # beta
        ],
        out_specs=pl.BlockSpec((B, tile_n), lambda j, k: (0, j)),
        scratch_shapes=[pltpu.VMEM((B, tile_n), jnp.float32)],
        compiler_params=pltpu.CompilerParams(
            dimension_semantics=("parallel", "arbitrary"),
            vmem_limit_bytes=int(vmem_budget),
        ),
    )(x, w_t, g2, b2)


# ----------------------------------------------------------------------------
# Module wrapper (one-time parameter prep hoisted out of the per-call path)
# ----------------------------------------------------------------------------
class DisentanglerTPU:
    """Fused nn.Linear(D, D) + nn.BatchNorm1d(D) forward (training-mode stats)."""

    def __init__(self, weight, bias, gamma, beta, *, tile_n=None, tile_k=None):
        weight = jnp.asarray(weight)
        gamma = jnp.asarray(gamma)
        beta = jnp.asarray(beta)
        d_out, d_in = weight.shape
        assert d_out == d_in, "Disentangler uses a square emb_dim x emb_dim Linear"
        self.d = d_out
        # The Linear bias shifts every feature column uniformly; BatchNorm's
        # batch mean removes it exactly -> drop it (saves the add and its DMA).
        del bias

        self._vmem_budget = _vmem_budget_bytes()
        d128 = _round_up(self.d, LANE)

        # Small-D fast path: single block, no padding, no grid (covers the
        # module's real emb_dim=32 case; avoids 16x padded MXU work + extra
        # HBM passes). Assumes moderate batch sizes.
        self._small = self.d <= 256
        if self._small:
            self.w_t = weight.T                         # (in, out) once, at init
            self.g2 = gamma.reshape(1, self.d)
            self.b2 = beta.reshape(1, self.d)
            self.tile_n = self.tile_k = None
            return

        # Gridded path: generation-aware tile defaults.
        if tile_n is None:
            tile_n = 128 if _is_v5e() else 256          # match MXU width
        if tile_k is None:
            tile_k = 2048
        tile_n = min(_round_up(tile_n, LANE), d128)
        tile_k = min(_round_up(tile_k, LANE), d128)
        # Keep the double-buffered weight tile within half the VMEM budget.
        w_item = jnp.dtype(weight.dtype).itemsize
        while 2 * tile_k * tile_n * w_item > self._vmem_budget // 2 and tile_k > LANE:
            tile_k = max(LANE, _round_up(tile_k // 2, LANE))
        while 2 * tile_k * tile_n * w_item > self._vmem_budget // 2 and tile_n > LANE:
            tile_n = max(LANE, _round_up(tile_n // 2, LANE))
        self.tile_n, self.tile_k = int(tile_n), int(tile_k)

        k_pad = _round_up(self.d, self.tile_k)
        n_pad = _round_up(self.d, self.tile_n)
        # One-time parameter prep (transpose + zero pad), never repeated per call.
        self.w_t = jnp.pad(weight.T, ((0, k_pad - self.d), (0, n_pad - self.d)))
        self.g2 = jnp.pad(gamma.reshape(1, self.d), ((0, 0), (0, n_pad - self.d)))
        self.b2 = jnp.pad(beta.reshape(1, self.d), ((0, 0), (0, n_pad - self.d)))

    def __call__(self, x):
        # TODO(synk): stack multiple Disentangler instances along a leading
        # "parallel" grid axis in one pallas_call to amortize launch/DMA overhead.
        if self._small:
            return _forward_small(x, self.w_t, self.g2, self.b2)
        return _forward_grid(x, self.w_t, self.g2, self.b2,
                             tile_n=self.tile_n, tile_k=self.tile_k,
                             vmem_budget=self._vmem_budget)


# ----------------------------------------------------------------------------
# Reference + test
# ----------------------------------------------------------------------------
def _reference(x, weight, bias, gamma, beta):
    y = jnp.dot(x, weight.T, precision=jax.lax.Precision.HIGHEST) + bias
    mean = jnp.mean(y, axis=0, keepdims=True)
    var = jnp.mean((y - mean) ** 2, axis=0, keepdims=True)
    return gamma * (y - mean) / jnp.sqrt(var + EPS) + beta


if __name__ == "__main__":
    key = jax.random.PRNGKey(0)
    k1, k2, k3, k4, k5, k6, k7, k8 = jax.random.split(key, 8)

    # ---- small case matching the module's natural size (batch=8, emb_dim=32) ----
    B, D = 8, 32
    x = jax.random.normal(k1, (B, D), jnp.float32)
    bound = 1.0 / (D ** 0.5)
    weight = jax.random.uniform(k2, (D, D), jnp.float32, -bound, bound)
    bias = jax.random.uniform(k3, (D,), jnp.float32, -bound, bound)
    gamma = jnp.ones((D,), jnp.float32)           # BatchNorm1d default affine init
    beta = jnp.zeros((D,), jnp.float32)

    mod = DisentanglerTPU(weight, bias, gamma, beta)
    out = jax.block_until_ready(mod(x))
    ref = _reference(x, weight, bias, gamma, beta)
    assert out.shape == (B, D)
    assert jnp.allclose(out, ref, atol=1e-4, rtol=1e-4), "small-D fast path mismatch"

    # ---- larger case: exercises the gridded K reduction + ragged-N masked store ----
    B2, D2 = 16, 320
    x2 = jax.random.normal(k4, (B2, D2), jnp.float32)
    bound2 = 1.0 / (D2 ** 0.5)
    weight2 = jax.random.uniform(k5, (D2, D2), jnp.float32, -bound2, bound2)
    bias2 = jax.random.uniform(k6, (D2,), jnp.float32, -bound2, bound2)
    gamma2 = 1.0 + 0.1 * jax.random.normal(k7, (D2,), jnp.float32)
    beta2 = 0.1 * jax.random.normal(k8, (D2,), jnp.float32)

    mod2 = DisentanglerTPU(weight2, bias2, gamma2, beta2, tile_n=128, tile_k=128)
    out2 = jax.block_until_ready(mod2(x2))
    ref2 = _reference(x2, weight2, bias2, gamma2, beta2)
    assert out2.shape == (B2, D2)
    assert jnp.allclose(out2, ref2, atol=2e-3, rtol=2e-3), "gridded path mismatch"

    print("KERNEL_OK")
</pallas_src>

<mosaic_0001>
module attributes {stable_mosaic.version = 11 : i64} {
  func.func @_disentangler_small_kernel(%arg0: memref<8x32xf32, #tpu.memory_space<vmem>>, %arg1: memref<32x32xf32, #tpu.memory_space<vmem>>, %arg2: memref<1x32xf32, #tpu.memory_space<vmem>>, %arg3: memref<1x32xf32, #tpu.memory_space<vmem>>, %arg4: memref<8x32xf32, #tpu.memory_space<vmem>>) attributes {dimension_semantics = [], scalar_prefetch = 0 : i64, scratch_operands = 0 : i64, tpu.core_type = #tpu.core_type<tc>} {
    %c0 = arith.constant 0 : index
    %c0_0 = arith.constant 0 : index
    %0 = vector.load %arg0[%c0, %c0_0] : memref<8x32xf32, #tpu.memory_space<vmem>>, vector<8x32xf32>
    %c0_1 = arith.constant 0 : index
    %c0_2 = arith.constant 0 : index
    %1 = vector.load %arg1[%c0_1, %c0_2] : memref<32x32xf32, #tpu.memory_space<vmem>>, vector<32x32xf32>
    %cst = arith.constant dense<0.000000e+00> : vector<8x32xf32>
    %2 = tpu.matmul %0, %1, %cst {dimension_numbers = #tpu.dot_dimension_numbers<[1], [0], [0], [1], [0, 0, 1, 1], [], []>} : vector<8x32xf32>, vector<32x32xf32>, vector<8x32xf32> -> vector<8x32xf32>
    %c0_3 = arith.constant 0 : index
    %c0_4 = arith.constant 0 : index
    %3 = vector.load %arg2[%c0_3, %c0_4] : memref<1x32xf32, #tpu.memory_space<vmem>>, vector<1x32xf32>
    %c0_5 = arith.constant 0 : index
    %c0_6 = arith.constant 0 : index
    %4 = vector.load %arg3[%c0_5, %c0_6] : memref<1x32xf32, #tpu.memory_space<vmem>>, vector<1x32xf32>
    %cst_7 = arith.constant dense<0.000000e+00> : vector<32xf32>
    %5 = vector.multi_reduction <add>, %2, %cst_7 [0] : vector<8x32xf32> to vector<32xf32>
    %6 = vector.shape_cast %5 : vector<32xf32> to vector<1x32xf32>
    %cst_8 = arith.constant 1.250000e-01 : f32
    %7 = vector.broadcast %cst_8 : f32 to vector<1x32xf32>
    %8 = arith.mulf %6, %7 : vector<1x32xf32>
    %9 = vector.broadcast %8 : vector<1x32xf32> to vector<8x32xf32>
    %10 = arith.subf %2, %9 : vector<8x32xf32>
    %11 = arith.mulf %10, %10 : vector<8x32xf32>
    %cst_9 = arith.constant dense<0.000000e+00> : vector<32xf32>
    %12 = vector.multi_reduction <add>, %11, %cst_9 [0] : vector<8x32xf32> to vector<32xf32>
    %13 = vector.shape_cast %12 : vector<32xf32> to vector<1x32xf32>
    %cst_10 = arith.constant 1.250000e-01 : f32
    %14 = vector.broadcast %cst_10 : f32 to vector<1x32xf32>
    %15 = arith.mulf %13, %14 : vector<1x32xf32>
    %cst_11 = arith.constant 9.99999974E-6 : f32
    %16 = vector.broadcast %cst_11 : f32 to vector<1x32xf32>
    %17 = arith.addf %15, %16 : vector<1x32xf32>
    %18 = math.rsqrt %17 : vector<1x32xf32>
    %19 = arith.mulf %3, %18 : vector<1x32xf32>
    %20 = arith.mulf %8, %19 : vector<1x32xf32>
    %21 = arith.subf %4, %20 : vector<1x32xf32>
    %22 = vector.broadcast %19 : vector<1x32xf32> to vector<8x32xf32>
    %23 = arith.mulf %2, %22 : vector<8x32xf32>
    %24 = vector.broadcast %21 : vector<1x32xf32> to vector<8x32xf32>
    %25 = arith.addf %23, %24 : vector<8x32xf32>
    %c0_12 = arith.constant 0 : index
    %c0_13 = arith.constant 0 : index
    %26 = vector.load %arg4[%c0_12, %c0_13] : memref<8x32xf32, #tpu.memory_space<vmem>>, vector<8x32xf32>
    tpu.vector_store %arg4[%c0_12, %c0_13], %25 {strides = array<i32>} : memref<8x32xf32, #tpu.memory_space<vmem>>, vector<8x32xf32>,
    return
  }
}

</mosaic_0001>

<llo_original>
// kernel: _forward_small.1
$region0: #{_forward_small.1}
  #allocation0 [shape = 'u32[]', space=smem, size = 0x4, offset = 0x4, fixed_abs, tag = 'smem constant byte address 0x4 - core index']
  #allocation1 [shape = 'u32[144,128]{1,0:T(1,128)}', space=vmem, size = 0x12000, scoped, tag = 'internal scratch']
  %s0 = inlined_call_operand.hbm [shape: f32[8,32], index: 0, kind: input, shape index: {}]
  %s1 = inlined_call_operand.hbm [shape: f32[32,32], index: 1, kind: input, shape index: {}]
  %s2 = inlined_call_operand.vmem [shape: f32[1,32], index: 2, kind: input, shape index: {}]
  %s3 = inlined_call_operand.vmem [shape: f32[1,32], index: 3, kind: input, shape index: {}]
  %s4 = inlined_call_operand.hbm [shape: f32[8,32], index: 4, kind: output, shape index: {}]
  %s5 = sld [smem:[#allocation0]]
  $region34: #{_forward_small.1} parent=0
    _
  %s7 = ssub.s32 1, %s5
  %s8 = scalar_select 0, %s7, %s5
  $region1: #{_forward_small.1} parent=0
    #allocation2 [shape = 'u8[4096]{0}', space=vmem, size = 0x1000, scoped, tag = 'input window, operand 0, single buffered']
    #allocation3 [shape = 's32[1]{0}', space=sflag, size = 0x4, scoped, tag = 'scoped memory for _forward_small.1']
    #allocation4 [shape = 's32[1]{0}', space=sflag, size = 0x4, scoped, tag = 'scoped memory for _forward_small.1']
    #allocation5 [shape = 'u8[16384]{0}', space=vmem, size = 0x4000, scoped, tag = 'input window, operand 1, single buffered']
    #allocation6 [shape = 's32[1]{0}', space=sflag, size = 0x4, scoped, tag = 'scoped memory for _forward_small.1']
    #allocation7 [shape = 'u8[4096]{0}', space=vmem, size = 0x1000, scoped, tag = 'output window, operand 0, single buffered']
    %9 = vsyncpa [#allocation3], 0
    %10 = vsyncpa [#allocation6], 0
    %11 = vsyncpa [#allocation4], 0
    // Predicated region
    $region2: #{_forward_small.1} parent=1 // pred_check
      _
    $region3: #{_forward_small.1} parent=1 // pred_check_branch
      %13 = sbr.rel (0) target = $region5
    $region4: #{_forward_small.1} parent=1 // pred_region
      %s15 = ssub.s32 128, 128
      %16 = vsyncadd [#allocation3], %s15
      %s18 = sshll.u32 [#allocation2], 4
      %s19 = int_to_ptr.vmem [resolvable:$true] %s18
      %21 = dma.hbm_to_vmem [thread:$0]  %s0, 128, %s19, [#allocation3]
    $region5: #{_forward_small.1} parent=1 // pred_fallthru
      _
    // Predicated region
    $region6: #{_forward_small.1} parent=1 // pred_check
      _
    $region7: #{_forward_small.1} parent=1 // pred_check_branch
      %23 = sbr.rel (0) target = $region9
    $region8: #{_forward_small.1} parent=1 // pred_region
      %s25 = ssub.s32 512, 512
      %26 = vsyncadd [#allocation6], %s25
      %s27 = sshll.u32 [#allocation5], 4
      %s28 = int_to_ptr.vmem [resolvable:$true] %s27
      %33 = dma.hbm_to_vmem [thread:$0]  %s1, 512, %s28, [#allocation6], 128, 128, 8
    $region9: #{_forward_small.1} parent=1 // pred_fallthru
      _
    // Predicated region
    $region10: #{_forward_small.1} parent=1 // pred_check
      _
    $region11: #{_forward_small.1} parent=1 // pred_check_branch
      %35 = sbr.rel (0) target = $region13
    $region12: #{_forward_small.1} parent=1 // pred_region
      _
    $region13: #{_forward_small.1} parent=1 // pred_fallthru
      _
    // Predicated region
    $region14: #{_forward_small.1} parent=1 // pred_check
      _
    $region15: #{_forward_small.1} parent=1 // pred_check_branch
      %37 = sbr.rel (0) target = $region17
    $region16: #{_forward_small.1} parent=1 // pred_region
      _
    $region17: #{_forward_small.1} parent=1 // pred_fallthru
      _
    // Predicated region
    $region18: #{_forward_small.1} parent=1 // pred_check
      _
    $region19: #{_forward_small.1} parent=1 // pred_check_branch
      %39 = sbr.rel (0) target = $region21
    $region20: #{_forward_small.1} parent=1 // pred_region
      %40 = dma.done [#allocation3], 128
    $region21: #{_forward_small.1} parent=1 // pred_fallthru
      _
    // Predicated region
    $region22: #{_forward_small.1} parent=1 // pred_check
      _
    $region23: #{_forward_small.1} parent=1 // pred_check_branch
      %42 = sbr.rel (0) target = $region25
    $region24: #{_forward_small.1} parent=1 // pred_region
      %43 = dma.done [#allocation6], 512
    $region25: #{_forward_small.1} parent=1 // pred_fallthru
      _
    %v44 = vld [vmem:[#allocation2] sm:$0xff]
    %v45 = vld [vmem:[#allocation5] sm:$0xff]
    %v46 = vld [vmem:[#allocation5 + $0x8] sm:$0xff]
    %v47 = vld [vmem:[#allocation5 + $0x10] sm:$0xff]
    %v48 = vld [vmem:[#allocation5 + $0x18] sm:$0xff]
    %vm49 = vcmask 261120
    %v51 = vsel %vm49, %v44, 0
    %53 = vmatprep.subr.mxu0 0.0
    %54 = vmatpush1.msra.mxu0 0.0
    %55 = vmatprep.subr.mxu0 0.0
    %56 = vmatpush1.msra.mxu0 0.0
    %57 = vmatprep.subr.mxu0 0.0
    %58 = vmatpush1.msra.mxu0 0.0
    %59 = vmatprep.subr.mxu0 0.0
    %60 = vmatpush1.msra.mxu0 0.0
    %61 = vmatprep.subr.mxu0 0.0
    %62 = vmatpush1.msra.mxu0 0.0
    %63 = vmatprep.subr.mxu0 0.0
    %64 = vmatpush1.msra.mxu0 0.0
    %65 = vmatprep.subr.mxu0 0.0
    %66 = vmatpush1.msra.mxu0 0.0
    %67 = vmatprep.subr.mxu0 0.0
    %68 = vmatpush1.msra.mxu0 0.0
    %69 = vmatprep.subr.mxu0 0.0
    %70 = vmatpush1.msra.mxu0 0.0
    %71 = vmatprep.subr.mxu0 0.0
    %72 = vmatpush1.msra.mxu0 0.0
    %73 = vmatprep.subr.mxu0 0.0
    %74 = vmatpush1.msra.mxu0 0.0
    %75 = vmatprep.subr.mxu0 0.0
    %76 = vmatpush1.msra.mxu0 0.0
    %77 = vmatprep.subr.mxu0 0.0
    %78 = vmatpush1.msra.mxu0 %v48
    %79 = vmatprep.subr.mxu0 0.0
    %80 = vmatpush1.msra.mxu0 %v47
    %81 = vmatprep.subr.mxu0 0.0
    %82 = vmatpush1.msra.mxu0 %v46
    %83 = vmatprep.subr.mxu0 0.0
    %84 = vmatpush1.msra.mxu0 %v45
    %85 = vmatprep.subr.mxu0 0.0
    %86 = vmatpush2.msra.mxu0 0.0
    %87 = vmatprep.subr.mxu0 0.0
    %88 = vmatpush2.msra.mxu0 0.0
    %89 = vmatprep.subr.mxu0 0.0
    %90 = vmatpush2.msra.mxu0 0.0
    %91 = vmatprep.subr.mxu0 0.0
    %92 = vmatpush2.msra.mxu0 0.0
    %93 = vmatprep.subr.mxu0 0.0
    %94 = vmatpush2.msra.mxu0 0.0
    %95 = vmatprep.subr.mxu0 0.0
    %96 = vmatpush2.msra.mxu0 0.0
    %97 = vmatprep.subr.mxu0 0.0
    %98 = vmatpush2.msra.mxu0 0.0
    %99 = vmatprep.subr.mxu0 0.0
    %100 = vmatpush2.msra.mxu0 0.0
    %101 = vmatprep.subr.mxu0 0.0
    %102 = vmatpush2.msra.mxu0 0.0
    %103 = vmatprep.subr.mxu0 0.0
    %104 = vmatpush2.msra.mxu0 0.0
    %105 = vmatprep.subr.mxu0 0.0
    %106 = vmatpush2.msra.mxu0 0.0
    %107 = vmatprep.subr.mxu0 0.0
    %108 = vmatpush2.msra.mxu0 0.0
    %109 = vmatprep.subr.mxu0 0.0
    %110 = vmatpush2.msra.mxu0 0.0
    %111 = vmatprep.subr.mxu0 0.0
    %112 = vmatpush2.msra.mxu0 0.0
    %113 = vmatprep.subr.mxu0 0.0
    %114 = vmatpush2.msra.mxu0 0.0
    %115 = vmatprep.subr.mxu0 0.0
    %116 = vmatpush2.msra.mxu0 0.0
    %117 = vmatprep.mubr.f32.mxu0 0.0
    %118 = vmatmul.mubr.f32.gmra.mxu0 %v51
    %v119 = vpop.f32.mrf.mxu0
    %v120 = vadd.f32 0.0, %v119
    %v121 = vpop.f32.mrf.mxu0
    %122 = vdwg.mxu0
    %v123 = vld [vmem:[%s2] sm:$0x1]
    %v124 = vld [vmem:[%s3] sm:$0x1]
    %v125 = vsel %vm49, %v120, 0.0
    %v126 = vrot.slane %v125, 4
    %v127 = vadd.f32 %v125, %v126
    %v128 = vrot.slane %v127, 2
    %v129 = vadd.f32 %v127, %v128
    %v130 = vrot.slane %v129, 1
    %v131 = vadd.f32 %v129, %v130
    %v132 = vmul.f32 %v131, 0.125
    %v133 = vsub.f32 %v120, %v132
    %v134 = vmul.f32 %v133, %v133
    %v135 = vsel %vm49, %v134, 0.0
    %v136 = vrot.slane %v135, 4
    %v137 = vadd.f32 %v135, %v136
    %v138 = vrot.slane %v137, 2
    %v139 = vadd.f32 %v137, %v138
    %v140 = vrot.slane %v139, 1
    %v141 = vadd.f32 %v139, %v140
    %v142 = vmul.f32 %v141, 0.125
    %v143 = vadd.f32 %v142, 1e-05
    %v144 = vrsqrt.pop %v143
    %v145 = vmul.f32 %v123, %v144
    %v146 = vmul.f32 %v132, %v145
    %v147 = vsub.f32 %v124, %v146
    %v149 = vlaneseq
    %v150 = vshrl.u32 %v149, 7
    %v151 = vsub.s32 0, %v150
    %v152 = vrot.slane %v145, %v151
    %v154 = vmul.f32 %v120, %v152
    %v156 = vlaneseq
    %v157 = vshrl.u32 %v156, 7
    %v158 = vsub.s32 0, %v157
    %v159 = vrot.slane %v147, %v158
    %v161 = vadd.f32 %v154, %v159
    %162 = vst.msk [vmem:[#allocation7] sm:$0xff] %vm49, %v161
    // Predicated region
    $region26: #{_forward_small.1} parent=1 // pred_check
      _
    $region27: #{_forward_small.1} parent=1 // pred_check_branch
      %164 = sbr.rel (0) target = $region29
    $region28: #{_forward_small.1} parent=1 // pred_region
      %s166 = ssub.s32 128, 128
      %167 = vsyncadd [#allocation4], %s166
      %s169 = sshll.u32 [#allocation7], 4
      %s170 = int_to_ptr.vmem [resolvable:$true] %s169
      %172 = dma.vmem_to_hbm [thread:$0]  %s170, 128, %s4, [#allocation4]
    $region29: #{_forward_small.1} parent=1 // pred_fallthru
      _
    // Predicated region
    $region30: #{_forward_small.1} parent=1 // pred_check
      _
    $region31: #{_forward_small.1} parent=1 // pred_check_branch
      %174 = sbr.rel (0) target = $region33
    $region32: #{_forward_small.1} parent=1 // pred_region
      %175 = dma.done [#allocation4], 128
    $region33: #{_forward_small.1} parent=1 // pred_fallthru
      _
    %176 = vsyncpa [#allocation3], 1
    %177 = vsyncpa [#allocation6], 1
    %178 = vsyncpa [#allocation4], 1

</llo_original>
